<compile_context>
chip_gen: v7x
topology: tpu7x:2x2x1
jax: 0.10.0
libtpu: 0.0.40
codegen_flags: <defaults>
</compile_context>

<pallas_src>
import functools

import jax
import jax.numpy as jnp
from jax.experimental import pallas as pl
from jax.experimental.pallas import tpu as pltpu


# ----------------------------------------------------------------------------
# Pallas kernel: per-row (per-sample) scaling of a lane-dense 2D view.
# ----------------------------------------------------------------------------
def _scale_rows_kernel(x_ref, s_ref, o_ref):
    # x_ref: (tb, tl) tile of flattened activations (activation dtype).
    # s_ref: (tb, 1)  per-sample scale (mask / keep_prob) in float32.
    # Scale in f32, cast only the product back to the output dtype.
    x = x_ref[...].astype(jnp.float32)
    o_ref[...] = (x * s_ref[...]).astype(o_ref.dtype)


def _sublane_align(itemsize):
    # (8,128) vreg tiling is f32-specific; sub-32-bit dtypes pack along sublanes.
    return {4: 8, 2: 16, 1: 32}.get(itemsize, 8)


def _vmem_and_block_budget():
    # v7x: 64 MiB physical VMEM per TC -> keep the scoped limit at 32 MiB and
    # ~4 MiB blocks.  v5e/v6e: 128 MiB physical -> 64 MiB limit, ~8 MiB blocks.
    try:
        kind = jax.devices()[0].device_kind.lower()
    except Exception:
        kind = ""
    if "v7" in kind:
        return 32 * 1024 * 1024, 4 * 1024 * 1024
    return 64 * 1024 * 1024, 8 * 1024 * 1024


def _pick_tiles(B, S, itemsize, target_block_bytes):
    # Lane tile: big multiple of 128 (unmasked, lane-dense stores) or the full
    # feature dim when it already fits.  cdiv + Pallas masking handle the tail.
    lane_cap = 8192
    tl = S if S <= lane_cap else lane_cap  # lane_cap is a multiple of 128

    sub = _sublane_align(itemsize)
    if B <= sub:
        tb = B  # full-extent block along rows satisfies the tiling rule
    else:
        row_bytes = max(tl * itemsize, 1)
        rows = min(B, max(sub, target_block_bytes // row_bytes))
        tb = max(sub, (rows // sub) * sub)  # aligned row tile, masked tail
    return tb, tl


def drop_path_scale(x, scale):
    """out[b, ...] = x[b, ...] * scale[b]  via a tiled, lane-dense Pallas kernel."""
    orig_shape = x.shape
    B = orig_shape[0]
    S = 1
    for d in orig_shape[1:]:
        S *= d

    x2 = x.reshape(B, S)
    s2 = scale.reshape(B, 1).astype(jnp.float32)  # keep scale in f32

    vmem_limit, target_block_bytes = _vmem_and_block_budget()
    tb, tl = _pick_tiles(B, S, jnp.dtype(x2.dtype).itemsize, target_block_bytes)

    grid = (pl.cdiv(B, tb), pl.cdiv(S, tl))
    out = pl.pallas_call(
        _scale_rows_kernel,
        out_shape=jax.ShapeDtypeStruct((B, S), x2.dtype),
        grid=grid,
        in_specs=[
            pl.BlockSpec((tb, tl), lambda i, j: (i, j)),
            pl.BlockSpec((tb, 1), lambda i, j: (i, 0)),
        ],
        out_specs=pl.BlockSpec((tb, tl), lambda i, j: (i, j)),
        input_output_aliases={0: 0},  # reuse x's HBM buffer for the output
        compiler_params=pltpu.CompilerParams(
            dimension_semantics=("parallel", "parallel"),
            vmem_limit_bytes=vmem_limit,
        ),
    )(x2, s2)

    return out.reshape(orig_shape)


# ----------------------------------------------------------------------------
# DropPath forward (eval -> identity, training -> Pallas-scaled output).
# ----------------------------------------------------------------------------
def drop_path(x, drop_prob=0.0, training=False, *, key=None):
    if drop_prob == 0.0 or not training:
        return x
    if key is None:
        raise ValueError("drop_path(training=True) requires an explicit PRNG `key`.")
    keep_prob = 1.0 - drop_prob
    B = x.shape[0]
    # random_tensor = floor(keep_prob + U[0,1)) -> Bernoulli(keep_prob) in {0,1}
    u = jax.random.uniform(key, (B,), dtype=jnp.float32)
    random_tensor = jnp.floor(keep_prob + u)
    scale = random_tensor / keep_prob           # f32, applied in-kernel in f32
    return drop_path_scale(x, scale)


class DropPath:
    """Mirror of the PyTorch nn.Module (training flag toggled explicitly)."""

    def __init__(self, p):
        self.p = p
        self.training = True

    def __call__(self, x, key=None):
        return drop_path(x, self.p, self.training, key=key)


# ----------------------------------------------------------------------------
if __name__ == "__main__":
    B, C, H, W = 2, 4, 16, 16
    key = jax.random.PRNGKey(0)
    kx, km = jax.random.split(key)
    x = jax.random.normal(kx, (B, C, H, W), jnp.float32)

    p = 0.25
    keep_prob = 1.0 - p

    # Training path: Pallas kernel applies the per-sample mask / keep_prob.
    fwd_train = jax.jit(functools.partial(drop_path, drop_prob=p, training=True))
    out_train = jax.block_until_ready(fwd_train(x, key=km))

    # Pure-JAX reference for correctness.
    u = jax.random.uniform(km, (B,), dtype=jnp.float32)
    mask = jnp.floor(keep_prob + u)
    ref = x * (mask / keep_prob)[:, None, None, None]
    assert out_train.shape == x.shape, out_train.shape
    assert out_train.dtype == x.dtype, out_train.dtype
    assert bool(jnp.all(jnp.isfinite(out_train)))
    assert jnp.allclose(out_train, ref, atol=1e-6, rtol=1e-6)

    # Non-128-multiple feature size (exercises the masked tail path, no padding).
    x_odd = jax.random.normal(kx, (3, 5, 7, 9), jnp.float32)
    out_odd = jax.block_until_ready(
        jax.jit(functools.partial(drop_path, drop_prob=p, training=True))(x_odd, key=km)
    )
    u3 = jax.random.uniform(km, (3,), dtype=jnp.float32)
    mask3 = jnp.floor(keep_prob + u3)
    ref_odd = x_odd * (mask3 / keep_prob)[:, None, None, None]
    assert jnp.allclose(out_odd, ref_odd, atol=1e-6, rtol=1e-6)

    # Eval path: identity (drop_prob handling only triggers in training).
    mod = DropPath(p)
    mod.training = False
    out_eval = jax.block_until_ready(mod(x))
    assert jnp.allclose(out_eval, x)

    print("KERNEL_OK")
</pallas_src>

<mosaic_0001>
module attributes {stable_mosaic.version = 11 : i64} {
  func.func @_scale_rows_kernel(%arg0: i32, %arg1: i32, %arg2: memref<2x1024xf32, #tpu.memory_space<vmem>>, %arg3: memref<2x1xf32, #tpu.memory_space<vmem>>, %arg4: memref<2x1024xf32, #tpu.memory_space<vmem>>) attributes {dimension_semantics = [#tpu.dimension_semantics<parallel>, #tpu.dimension_semantics<parallel>], iteration_bounds = array<i64: 1, 1>, scalar_prefetch = 0 : i64, scratch_operands = 0 : i64, tpu.core_type = #tpu.core_type<tc>, window_params = [{transform_indices = @transform_0, window_bounds = array<i64: 2, 1024>}, {transform_indices = @transform_1, window_bounds = array<i64: 2, 1>}, {transform_indices = @transform_2, window_bounds = array<i64: 2, 1024>}]} {
    %c0 = arith.constant 0 : index
    %c0_0 = arith.constant 0 : index
    %0 = vector.load %arg2[%c0, %c0_0] : memref<2x1024xf32, #tpu.memory_space<vmem>>, vector<2x1024xf32>
    %c0_1 = arith.constant 0 : index
    %c0_2 = arith.constant 0 : index
    %1 = vector.load %arg3[%c0_1, %c0_2] : memref<2x1xf32, #tpu.memory_space<vmem>>, vector<2x1xf32>
    %2 = vector.broadcast %1 : vector<2x1xf32> to vector<2x1024xf32>
    %3 = arith.mulf %0, %2 : vector<2x1024xf32>
    %c0_3 = arith.constant 0 : index
    %c0_4 = arith.constant 0 : index
    %4 = vector.load %arg4[%c0_3, %c0_4] : memref<2x1024xf32, #tpu.memory_space<vmem>>, vector<2x1024xf32>
    tpu.vector_store %arg4[%c0_3, %c0_4], %3 {strides = array<i32>} : memref<2x1024xf32, #tpu.memory_space<vmem>>, vector<2x1024xf32>,
    return
  }
  func.func @transform_0(%arg0: i32, %arg1: i32) -> (i32, i32) {
    %c0_i32 = arith.constant 0 : i32
    return %arg0, %arg1 : i32, i32
  }
  func.func @transform_1(%arg0: i32, %arg1: i32) -> (i32, i32) {
    %c0_i32 = arith.constant 0 : i32
    %c0_i32_0 = arith.constant 0 : i32
    return %arg0, %c0_i32 : i32, i32
  }
  func.func @transform_2(%arg0: i32, %arg1: i32) -> (i32, i32) {
    %c0_i32 = arith.constant 0 : i32
    return %arg0, %arg1 : i32, i32
  }
}

</mosaic_0001>

<llo_original>
// kernel: drop_path.1
$region0: #{drop_path.1}
  #allocation0 [shape = 'u32[]', space=smem, size = 0x4, offset = 0x4, fixed_abs, tag = 'smem constant byte address 0x4 - core index']
  #allocation1 [shape = 'u32[144,128]{1,0:T(1,128)}', space=vmem, size = 0x12000, scoped, tag = 'internal scratch']
  %s0 = inlined_call_operand.hbm [shape: f32[2,1024], index: 0, kind: input, shape index: {}, may-alias: {0,2}]
  %s1 = inlined_call_operand.hbm [shape: f32[2,1], index: 1, kind: input, shape index: {}]
  %s2 = inlined_call_operand.hbm [shape: f32[2,1024], index: 2, kind: output, shape index: {}, may-alias: {0,2}]
  %s3 = sld [smem:[#allocation0]]
  $region26: #{drop_path.1} parent=0
    _
  %s5 = ssub.s32 1, %s3
  %s6 = scalar_select 0, %s5, %s3
  $region1: #{drop_path.1} parent=0
    #allocation2 [shape = 'u8[8192]{0}', space=vmem, size = 0x2000, scoped, tag = 'input window, operand 0, single buffered']
    #allocation3 [shape = 's32[1]{0}', space=sflag, size = 0x4, scoped, tag = 'scoped memory for drop_path.1']
    #allocation4 [shape = 's32[1]{0}', space=sflag, size = 0x4, scoped, tag = 'scoped memory for drop_path.1']
    #allocation5 [shape = 'u8[1024]{0}', space=vmem, size = 0x400, scoped, tag = 'input window, operand 1, single buffered']
    #allocation6 [shape = 's32[1]{0}', space=sflag, size = 0x4, scoped, tag = 'scoped memory for drop_path.1']
    #allocation7 [shape = 'u8[8192]{0}', space=vmem, size = 0x2000, scoped, tag = 'output window, operand 0, single buffered']
    %7 = vsyncpa [#allocation3], 0
    %8 = vsyncpa [#allocation6], 0
    %9 = vsyncpa [#allocation4], 0
    // Predicated region
    $region2: #{drop_path.1} parent=1 // pred_check
      _
    $region3: #{drop_path.1} parent=1 // pred_check_branch
      %11 = sbr.rel (0) target = $region5
    $region4: #{drop_path.1} parent=1 // pred_region
      %s13 = ssub.s32 256, 256
      %14 = vsyncadd [#allocation3], %s13
      %s16 = sshll.u32 [#allocation2], 4
      %s17 = int_to_ptr.vmem [resolvable:$true] %s16
      %19 = dma.hbm_to_vmem [thread:$0]  %s0, 256, %s17, [#allocation3]
    $region5: #{drop_path.1} parent=1 // pred_fallthru
      _
    // Predicated region
    $region6: #{drop_path.1} parent=1 // pred_check
      _
    $region7: #{drop_path.1} parent=1 // pred_check_branch
      %21 = sbr.rel (0) target = $region9
    $region8: #{drop_path.1} parent=1 // pred_region
      %s23 = ssub.s32 32, 32
      %24 = vsyncadd [#allocation6], %s23
      %s26 = sshll.u32 [#allocation5], 4
      %s27 = int_to_ptr.vmem [resolvable:$true] %s26
      %29 = dma.hbm_to_vmem [thread:$0]  %s1, 32, %s27, [#allocation6]
    $region9: #{drop_path.1} parent=1 // pred_fallthru
      _
    // Predicated region
    $region10: #{drop_path.1} parent=1 // pred_check
      _
    $region11: #{drop_path.1} parent=1 // pred_check_branch
      %31 = sbr.rel (0) target = $region13
    $region12: #{drop_path.1} parent=1 // pred_region
      %32 = dma.done [#allocation3], 256
    $region13: #{drop_path.1} parent=1 // pred_fallthru
      _
    // Predicated region
    $region14: #{drop_path.1} parent=1 // pred_check
      _
    $region15: #{drop_path.1} parent=1 // pred_check_branch
      %34 = sbr.rel (0) target = $region17
    $region16: #{drop_path.1} parent=1 // pred_region
      %35 = dma.done [#allocation6], 32
    $region17: #{drop_path.1} parent=1 // pred_fallthru
      _
    %v36 = vld [vmem:[#allocation2] sm:$0xff]
    %v37 = vld [vmem:[#allocation2 + $0x8] sm:$0xff]
    %v38 = vld [vmem:[#allocation5] sm:$0x3]
    %40 = vset.pattern.permute.xlu0 0
    %41 = vperm.xlu0 %40, %v38
    %v42 = vpop.permute.xlu0 %41
    %v44 = vunpack.c.l.s4 269488144
    %v45 = vunpack.c.0.s8 %v44
    %v46 = vlaneseq
    %v47 = vshrl.u32 %v46, 7
    %v48 = vsub.s32 %v45, %v47
    %v49 = vrot.slane %v42, %v48
    %v51 = vmul.f32 %v36, %v49
    %v52 = vmul.f32 %v37, %v49
    %53 = vst [vmem:[#allocation7] sm:$0xff] %v51
    %54 = vst [vmem:[#allocation7 + $0x8] sm:$0xff] %v52
    // Predicated region
    $region18: #{drop_path.1} parent=1 // pred_check
      _
    $region19: #{drop_path.1} parent=1 // pred_check_branch
      %56 = sbr.rel (0) target = $region21
    $region20: #{drop_path.1} parent=1 // pred_region
      %s58 = ssub.s32 256, 256
      %59 = vsyncadd [#allocation4], %s58
      %s61 = sshll.u32 [#allocation7], 4
      %s62 = int_to_ptr.vmem [resolvable:$true] %s61
      %64 = dma.vmem_to_hbm [thread:$0]  %s62, 256, %s2, [#allocation4]
    $region21: #{drop_path.1} parent=1 // pred_fallthru
      _
    // Predicated region
    $region22: #{drop_path.1} parent=1 // pred_check
      _
    $region23: #{drop_path.1} parent=1 // pred_check_branch
      %66 = sbr.rel (0) target = $region25
    $region24: #{drop_path.1} parent=1 // pred_region
      %67 = dma.done [#allocation4], 256
    $region25: #{drop_path.1} parent=1 // pred_fallthru
      _
    %68 = vsyncpa [#allocation3], 1
    %69 = vsyncpa [#allocation6], 1
    %70 = vsyncpa [#allocation4], 1

</llo_original>
